<compile_context>
chip_gen: v6e
topology: v6e:2x2x1
jax: 0.10.0
libtpu: 0.0.40
codegen_flags: <defaults>
</compile_context>

<pallas_src>
import functools

import jax
import jax.numpy as jnp
from jax.experimental import pallas as pl
from jax.experimental.pallas import tpu as pltpu

IN_FEATURES = 28 * 28  # 784


def _round_up(x, m):
    return ((x + m - 1) // m) * m


def mlp_kernel(x_ref, w1_ref, b1_ref, w2_ref, b2_ref, o_ref):
    # Hidden layer: (T, 784)bf16 @ (784, Hp)bf16 -> f32, + bias, ReLU.
    h = jnp.dot(x_ref[...], w1_ref[...], preferred_element_type=jnp.float32)
    h = jnp.maximum(h + b1_ref[...], 0.0)
    # Output layer: (T, Hp)bf16 @ (Hp, Kp)bf16 -> f32, + bias.
    out = jnp.dot(h.astype(w2_ref.dtype), w2_ref[...],
                  preferred_element_type=jnp.float32)
    o_ref[...] = (out + b2_ref[...]).astype(o_ref.dtype)


@functools.partial(jax.jit, static_argnames=("tile_n",))
def fc_forward(x, w1, b1, w2, b2, *, tile_n=1024):
    """Forward pass of FCNeuralNetwork.

    x:  any shape whose trailing elements flatten to multiples of 784
        (e.g. (N, 1, 28, 28)).
    w1: (784, H)   (transposed vs. torch's nn.Linear.weight)
    b1: (H,) or (1, H)
    w2: (H, K)
    b2: (K,) or (1, K)
    Returns squeeze(logits), matching torch's `x.squeeze()`.
    """
    x2d = x.reshape(-1, IN_FEATURES)
    n = x2d.shape[0]
    h = w1.shape[1]
    k = w2.shape[1]

    # Lane-dense padding for hidden / output dims (zero columns are inert:
    # ReLU(0)=0 and padded w2 rows are zero, so the math is unchanged).
    h_pad = max(128, _round_up(h, 128))
    k_pad = max(128, _round_up(k, 128))

    # Batch tiling: keep tiles a multiple of 16 (bf16 sublane packing) and do
    # not over-allocate for small batches.
    tile_n = min(tile_n, _round_up(max(n, 1), 16))
    n_pad = _round_up(n, tile_n)

    # bf16 inputs / weights (halves HBM traffic on the dominant x stream),
    # f32 biases (added post-accumulation).
    x_p = jnp.pad(x2d.astype(jnp.bfloat16), ((0, n_pad - n), (0, 0)))
    w1_p = jnp.pad(w1.astype(jnp.bfloat16), ((0, 0), (0, h_pad - h)))
    b1_p = jnp.pad(b1.reshape(1, -1).astype(jnp.float32),
                   ((0, 0), (0, h_pad - h)))
    w2_p = jnp.pad(w2.astype(jnp.bfloat16),
                   ((0, h_pad - h), (0, k_pad - k)))
    b2_p = jnp.pad(b2.reshape(1, -1).astype(jnp.float32),
                   ((0, 0), (0, k_pad - k)))

    grid = (n_pad // tile_n,)

    cost = pl.CostEstimate(
        flops=2 * n_pad * (IN_FEATURES * h_pad + h_pad * k_pad),
        transcendentals=0,
        bytes_accessed=(n_pad * IN_FEATURES * 2          # x (bf16)
                        + IN_FEATURES * h_pad * 2        # w1
                        + h_pad * k_pad * 2              # w2
                        + (h_pad + k_pad) * 4            # biases
                        + n_pad * k_pad * 4),            # output (f32)
    )

    out_padded = pl.pallas_call(
        mlp_kernel,
        out_shape=jax.ShapeDtypeStruct((n_pad, k_pad), jnp.float32),
        grid=grid,
        in_specs=[
            pl.BlockSpec((tile_n, IN_FEATURES), lambda i: (i, 0)),  # x tile
            pl.BlockSpec((IN_FEATURES, h_pad), lambda i: (0, 0)),   # w1 resident
            pl.BlockSpec((1, h_pad), lambda i: (0, 0)),             # b1 resident
            pl.BlockSpec((h_pad, k_pad), lambda i: (0, 0)),         # w2 resident
            pl.BlockSpec((1, k_pad), lambda i: (0, 0)),             # b2 resident
        ],
        out_specs=pl.BlockSpec((tile_n, k_pad), lambda i: (i, 0)),
        compiler_params=pltpu.CompilerParams(
            dimension_semantics=("parallel",),
            vmem_limit_bytes=48 * 1024 * 1024,
        ),
        cost_estimate=cost,
    )(x_p, w1_p, b1_p, w2_p, b2_p)

    logits = out_padded[:n, :k]
    # torch: x.squeeze() — removes any size-1 dims.
    return jnp.squeeze(logits)


def xavier_uniform(key, fan_in, fan_out):
    # matches torch.nn.init.xavier_uniform_ (gain=1)
    limit = jnp.sqrt(6.0 / (fan_in + fan_out))
    return jax.random.uniform(
        key, (fan_in, fan_out), jnp.float32, minval=-limit, maxval=limit
    )


if __name__ == "__main__":
    H, K = 32, 10
    N = 8  # small batch (deliberately not a multiple of the default tile)

    key = jax.random.PRNGKey(0)
    kx, k1, k2 = jax.random.split(key, 3)

    # Deterministic Glorot (xavier_uniform) weights, zero biases — as in
    # FCNeuralNetwork(H, K, Glorot_initialization=True).
    w1 = xavier_uniform(k1, IN_FEATURES, H)   # stored (in, out)
    b1 = jnp.zeros((H,), jnp.float32)
    w2 = xavier_uniform(k2, H, K)
    b2 = jnp.zeros((K,), jnp.float32)

    # MNIST-like input (N, 1, 28, 28); forward flattens it to (N, 784).
    x = jax.random.normal(kx, (N, 1, 28, 28), jnp.float32)

    out = fc_forward(x, w1, b1, w2, b2)
    out = jax.block_until_ready(out)

    # f32 reference (kernel uses bf16 inputs -> slightly looser tolerance).
    ref = jnp.squeeze(
        jnp.maximum(x.reshape(-1, IN_FEATURES) @ w1 + b1, 0.0) @ w2 + b2
    )
    assert out.shape == (N, K), out.shape
    assert jnp.allclose(out, ref, atol=3e-2, rtol=3e-2), (
        float(jnp.max(jnp.abs(out - ref)))
    )

    print("KERNEL_OK")
</pallas_src>

<mosaic_0001>
module attributes {stable_mosaic.version = 11 : i64} {
  func.func @mlp_kernel(%arg0: i32, %arg1: memref<16x784xbf16, #tpu.memory_space<vmem>>, %arg2: memref<784x128xbf16, #tpu.memory_space<vmem>>, %arg3: memref<1x128xf32, #tpu.memory_space<vmem>>, %arg4: memref<128x128xbf16, #tpu.memory_space<vmem>>, %arg5: memref<1x128xf32, #tpu.memory_space<vmem>>, %arg6: memref<16x128xf32, #tpu.memory_space<vmem>>) attributes {dimension_semantics = [#tpu.dimension_semantics<parallel>], iteration_bounds = array<i64: 1>, scalar_prefetch = 0 : i64, scratch_operands = 0 : i64, tpu.core_type = #tpu.core_type<tc>, window_params = [{transform_indices = @transform_0, window_bounds = array<i64: 16, 784>}, {pipeline_mode = #tpu.pipeline_mode<synchronous>, transform_indices = @transform_1, window_bounds = array<i64: 784, 128>}, {pipeline_mode = #tpu.pipeline_mode<synchronous>, transform_indices = @transform_2, window_bounds = array<i64: 1, 128>}, {pipeline_mode = #tpu.pipeline_mode<synchronous>, transform_indices = @transform_3, window_bounds = array<i64: 128, 128>}, {pipeline_mode = #tpu.pipeline_mode<synchronous>, transform_indices = @transform_4, window_bounds = array<i64: 1, 128>}, {transform_indices = @transform_5, window_bounds = array<i64: 16, 128>}]} {
    %c0 = arith.constant 0 : index
    %c0_0 = arith.constant 0 : index
    %0 = vector.load %arg1[%c0, %c0_0] : memref<16x784xbf16, #tpu.memory_space<vmem>>, vector<16x784xbf16>
    %c0_1 = arith.constant 0 : index
    %c0_2 = arith.constant 0 : index
    %1 = vector.load %arg2[%c0_1, %c0_2] : memref<784x128xbf16, #tpu.memory_space<vmem>>, vector<784x128xbf16>
    %cst = arith.constant dense<0.000000e+00> : vector<16x128xf32>
    %2 = tpu.matmul %0, %1, %cst {dimension_numbers = #tpu.dot_dimension_numbers<[1], [0], [0], [1], [0, 0, 1, 1], [], []>} : vector<16x784xbf16>, vector<784x128xbf16>, vector<16x128xf32> -> vector<16x128xf32>
    %c0_3 = arith.constant 0 : index
    %c0_4 = arith.constant 0 : index
    %3 = vector.load %arg3[%c0_3, %c0_4] : memref<1x128xf32, #tpu.memory_space<vmem>>, vector<1x128xf32>
    %4 = vector.broadcast %3 : vector<1x128xf32> to vector<16x128xf32>
    %5 = arith.addf %2, %4 : vector<16x128xf32>
    %cst_5 = arith.constant 0.000000e+00 : f32
    %6 = vector.broadcast %cst_5 : f32 to vector<16x128xf32>
    %7 = arith.maximumf %5, %6 : vector<16x128xf32>
    %8 = arith.truncf %7 : vector<16x128xf32> to vector<16x128xbf16>
    %c0_6 = arith.constant 0 : index
    %c0_7 = arith.constant 0 : index
    %9 = vector.load %arg4[%c0_6, %c0_7] : memref<128x128xbf16, #tpu.memory_space<vmem>>, vector<128x128xbf16>
    %cst_8 = arith.constant dense<0.000000e+00> : vector<16x128xf32>
    %10 = tpu.matmul %8, %9, %cst_8 {dimension_numbers = #tpu.dot_dimension_numbers<[1], [0], [0], [1], [0, 0, 1, 1], [], []>} : vector<16x128xbf16>, vector<128x128xbf16>, vector<16x128xf32> -> vector<16x128xf32>
    %c0_9 = arith.constant 0 : index
    %c0_10 = arith.constant 0 : index
    %11 = vector.load %arg5[%c0_9, %c0_10] : memref<1x128xf32, #tpu.memory_space<vmem>>, vector<1x128xf32>
    %12 = vector.broadcast %11 : vector<1x128xf32> to vector<16x128xf32>
    %13 = arith.addf %10, %12 : vector<16x128xf32>
    %c0_11 = arith.constant 0 : index
    %c0_12 = arith.constant 0 : index
    %14 = vector.load %arg6[%c0_11, %c0_12] : memref<16x128xf32, #tpu.memory_space<vmem>>, vector<16x128xf32>
    tpu.vector_store %arg6[%c0_11, %c0_12], %13 {strides = array<i32>} : memref<16x128xf32, #tpu.memory_space<vmem>>, vector<16x128xf32>,
    return
  }
  func.func @transform_0(%arg0: i32) -> (i32, i32) {
    %c0_i32 = arith.constant 0 : i32
    %c0_i32_0 = arith.constant 0 : i32
    return %arg0, %c0_i32 : i32, i32
  }
  func.func @transform_1(%arg0: i32) -> (i32, i32) {
    %c0_i32 = arith.constant 0 : i32
    %c0_i32_0 = arith.constant 0 : i32
    %c0_i32_1 = arith.constant 0 : i32
    return %c0_i32, %c0_i32_0 : i32, i32
  }
  func.func @transform_2(%arg0: i32) -> (i32, i32) {
    %c0_i32 = arith.constant 0 : i32
    %c0_i32_0 = arith.constant 0 : i32
    %c0_i32_1 = arith.constant 0 : i32
    return %c0_i32, %c0_i32_0 : i32, i32
  }
  func.func @transform_3(%arg0: i32) -> (i32, i32) {
    %c0_i32 = arith.constant 0 : i32
    %c0_i32_0 = arith.constant 0 : i32
    %c0_i32_1 = arith.constant 0 : i32
    return %c0_i32, %c0_i32_0 : i32, i32
  }
  func.func @transform_4(%arg0: i32) -> (i32, i32) {
    %c0_i32 = arith.constant 0 : i32
    %c0_i32_0 = arith.constant 0 : i32
    %c0_i32_1 = arith.constant 0 : i32
    return %c0_i32, %c0_i32_0 : i32, i32
  }
  func.func @transform_5(%arg0: i32) -> (i32, i32) {
    %c0_i32 = arith.constant 0 : i32
    %c0_i32_0 = arith.constant 0 : i32
    return %arg0, %c0_i32 : i32, i32
  }
}

</mosaic_0001>

<llo_original>
// kernel: fc_forward.1
$region0: #{fc_forward.1}
  #allocation0 [shape = 'u32[]', space=smem, size = 0x4, offset = 0x4, fixed_abs, tag = 'smem constant byte address 0x4 - core index']
  #allocation1 [shape = 'u32[144,128]{1,0:T(1,128)}', space=vmem, size = 0x12000, scoped, tag = 'internal scratch']
  %s0 = inlined_call_operand.vmem [shape: bf16[16,784], index: 0, kind: input, shape index: {}]
  %s1 = inlined_call_operand.vmem [shape: bf16[784,128], index: 1, kind: input, shape index: {}]
  %s2 = inlined_call_operand.vmem [shape: f32[1,128], index: 2, kind: input, shape index: {}]
  %s3 = inlined_call_operand.vmem [shape: bf16[128,128], index: 3, kind: input, shape index: {}]
  %s4 = inlined_call_operand.vmem [shape: f32[1,128], index: 4, kind: input, shape index: {}]
  %s5 = inlined_call_operand.vmem [shape: f32[16,128], index: 5, kind: output, shape index: {}]
  %s6 = sld [smem:[#allocation0]]
  $region30: #{fc_forward.1} parent=0
    _
  %s8 = ssub.s32 1, %s6
  %s9 = scalar_select 0, %s8, %s6
  // Predicated region
  $region2: #{fc_forward.1} parent=0 // pred_check
    _
  $region3: #{fc_forward.1} parent=0 // pred_check_branch
    %11 = sbr.rel (0) target = $region5
  $region4: #{fc_forward.1} parent=0 // pred_region
    _
  $region5: #{fc_forward.1} parent=0 // pred_fallthru
    _
  // Predicated region
  $region6: #{fc_forward.1} parent=0 // pred_check
    _
  $region7: #{fc_forward.1} parent=0 // pred_check_branch
    %13 = sbr.rel (0) target = $region9
  $region8: #{fc_forward.1} parent=0 // pred_region
    _
  $region9: #{fc_forward.1} parent=0 // pred_fallthru
    _
  // Predicated region
  $region10: #{fc_forward.1} parent=0 // pred_check
    _
  $region11: #{fc_forward.1} parent=0 // pred_check_branch
    %15 = sbr.rel (0) target = $region13
  $region12: #{fc_forward.1} parent=0 // pred_region
    _
  $region13: #{fc_forward.1} parent=0 // pred_fallthru
    _
  // Predicated region
  $region14: #{fc_forward.1} parent=0 // pred_check
    _
  $region15: #{fc_forward.1} parent=0 // pred_check_branch
    %17 = sbr.rel (0) target = $region17
  $region16: #{fc_forward.1} parent=0 // pred_region
    _
  $region17: #{fc_forward.1} parent=0 // pred_fallthru
    _
  // Predicated region
  $region18: #{fc_forward.1} parent=0 // pred_check
    _
  $region19: #{fc_forward.1} parent=0 // pred_check_branch
    %19 = sbr.rel (0) target = $region21
  $region20: #{fc_forward.1} parent=0 // pred_region
    _
  $region21: #{fc_forward.1} parent=0 // pred_fallthru
    _
  %v21 = vld [vmem:[%s0] sm:$0xff]
  %v22 = vld [vmem:[%s0 + $0x8] sm:$0xff]
  %v23 = vld [vmem:[%s0 + $0x10] sm:$0xff]
  %v24 = vld [vmem:[%s0 + $0x18] sm:$0xf]
  %v25 = vld [vmem:[%s0 + $0x1c] sm:$0xff]
  %v26 = vld [vmem:[%s0 + $0x24] sm:$0xff]
  %v27 = vld [vmem:[%s0 + $0x2c] sm:$0xff]
  %v28 = vld [vmem:[%s0 + $0x34] sm:$0xf]
  %v29 = vld [vmem:[%s1] sm:$0xf]
  %v30 = vld [vmem:[%s1 + $0x4] sm:$0xf]
  %v31 = vld [vmem:[%s1 + $0x8] sm:$0xf]
  %v32 = vld [vmem:[%s1 + $0xc] sm:$0xf]
  %v33 = vld [vmem:[%s1 + $0x10] sm:$0xf]
  %v34 = vld [vmem:[%s1 + $0x14] sm:$0xf]
  %v35 = vld [vmem:[%s1 + $0x18] sm:$0xf]
  %v36 = vld [vmem:[%s1 + $0x1c] sm:$0xf]
  %v37 = vld [vmem:[%s1 + $0x20] sm:$0xf]
  %v38 = vld [vmem:[%s1 + $0x24] sm:$0xf]
  %v39 = vld [vmem:[%s1 + $0x28] sm:$0xf]
  %v40 = vld [vmem:[%s1 + $0x2c] sm:$0xf]
  %v41 = vld [vmem:[%s1 + $0x30] sm:$0xf]
  %v42 = vld [vmem:[%s1 + $0x34] sm:$0xf]
  %v43 = vld [vmem:[%s1 + $0x38] sm:$0xf]
  %v44 = vld [vmem:[%s1 + $0x3c] sm:$0xf]
  %v45 = vld [vmem:[%s1 + $0x40] sm:$0xf]
  %v46 = vld [vmem:[%s1 + $0x44] sm:$0xf]
  %v47 = vld [vmem:[%s1 + $0x48] sm:$0xf]
  %v48 = vld [vmem:[%s1 + $0x4c] sm:$0xf]
  %v49 = vld [vmem:[%s1 + $0x50] sm:$0xf]
  %v50 = vld [vmem:[%s1 + $0x54] sm:$0xf]
  %v51 = vld [vmem:[%s1 + $0x58] sm:$0xf]
  %v52 = vld [vmem:[%s1 + $0x5c] sm:$0xf]
  %v53 = vld [vmem:[%s1 + $0x60] sm:$0xf]
  %v54 = vld [vmem:[%s1 + $0x64] sm:$0xf]
  %v55 = vld [vmem:[%s1 + $0x68] sm:$0xf]
  %v56 = vld [vmem:[%s1 + $0x6c] sm:$0xf]
  %v57 = vld [vmem:[%s1 + $0x70] sm:$0xf]
  %v58 = vld [vmem:[%s1 + $0x74] sm:$0xf]
  %v59 = vld [vmem:[%s1 + $0x78] sm:$0xf]
  %v60 = vld [vmem:[%s1 + $0x7c] sm:$0xf]
  %v61 = vld [vmem:[%s1 + $0x80] sm:$0xf]
  %v62 = vld [vmem:[%s1 + $0x84] sm:$0xf]
  %v63 = vld [vmem:[%s1 + $0x88] sm:$0xf]
  %v64 = vld [vmem:[%s1 + $0x8c] sm:$0xf]
  %v65 = vld [vmem:[%s1 + $0x90] sm:$0xf]
  %v66 = vld [vmem:[%s1 + $0x94] sm:$0xf]
  %v67 = vld [vmem:[%s1 + $0x98] sm:$0xf]
  %v68 = vld [vmem:[%s1 + $0x9c] sm:$0xf]
  %v69 = vld [vmem:[%s1 + $0xa0] sm:$0xf]
  %v70 = vld [vmem:[%s1 + $0xa4] sm:$0xf]
  %v71 = vld [vmem:[%s1 + $0xa8] sm:$0xf]
  %v72 = vld [vmem:[%s1 + $0xac] sm:$0xf]
  %v73 = vld [vmem:[%s1 + $0xb0] sm:$0xf]
  %v74 = vld [vmem:[%s1 + $0xb4] sm:$0xf]
  %v75 = vld [vmem:[%s1 + $0xb8] sm:$0xf]
  %v76 = vld [vmem:[%s1 + $0xbc] sm:$0xf]
  %v77 = vld [vmem:[%s1 + $0xc0] sm:$0xf]
  %v78 = vld [vmem:[%s1 + $0xc4] sm:$0xf]
  %v79 = vld [vmem:[%s1 + $0xc8] sm:$0xf]
  %v80 = vld [vmem:[%s1 + $0xcc] sm:$0xf]
  %v81 = vld [vmem:[%s1 + $0xd0] sm:$0xf]
  %v82 = vld [vmem:[%s1 + $0xd4] sm:$0xf]
  %v83 = vld [vmem:[%s1 + $0xd8] sm:$0xf]
  %v84 = vld [vmem:[%s1 + $0xdc] sm:$0xf]
  %v85 = vld [vmem:[%s1 + $0xe0] sm:$0xf]
  %v86 = vld [vmem:[%s1 + $0xe4] sm:$0xf]
  %v87 = vld [vmem:[%s1 + $0xe8] sm:$0xf]
  %v88 = vld [vmem:[%s1 + $0xec] sm:$0xf]
  %v89 = vld [vmem:[%s1 + $0xf0] sm:$0xf]
  %v90 = vld [vmem:[%s1 + $0xf4] sm:$0xf]
  %v91 = vld [vmem:[%s1 + $0xf8] sm:$0xf]
  %v92 = vld [vmem:[%s1 + $0xfc] sm:$0xf]
  %v93 = vld [vmem:[%s1 + $0x100] sm:$0xf]
  %v94 = vld [vmem:[%s1 + $0x104] sm:$0xf]
  %v95 = vld [vmem:[%s1 + $0x108] sm:$0xf]
  %v96 = vld [vmem:[%s1 + $0x10c] sm:$0xf]
  %v97 = vld [vmem:[%s1 + $0x110] sm:$0xf]
  %v98 = vld [vmem:[%s1 + $0x114] sm:$0xf]
  %v99 = vld [vmem:[%s1 + $0x118] sm:$0xf]
  %v100 = vld [vmem:[%s1 + $0x11c] sm:$0xf]
  %v101 = vld [vmem:[%s1 + $0x120] sm:$0xf]
  %v102 = vld [vmem:[%s1 + $0x124] sm:$0xf]
  %v103 = vld [vmem:[%s1 + $0x128] sm:$0xf]
  %v104 = vld [vmem:[%s1 + $0x12c] sm:$0xf]
  %v105 = vld [vmem:[%s1 + $0x130] sm:$0xf]
  %v106 = vld [vmem:[%s1 + $0x134] sm:$0xf]
  %v107 = vld [vmem:[%s1 + $0x138] sm:$0xf]
  %v108 = vld [vmem:[%s1 + $0x13c] sm:$0xf]
  %v109 = vld [vmem:[%s1 + $0x140] sm:$0xf]
  %v110 = vld [vmem:[%s1 + $0x144] sm:$0xf]
  %v111 = vld [vmem:[%s1 + $0x148] sm:$0xf]
  %v112 = vld [vmem:[%s1 + $0x14c] sm:$0xf]
  %v113 = vld [vmem:[%s1 + $0x150] sm:$0xf]
  %v114 = vld [vmem:[%s1 + $0x154] sm:$0xf]
  %v115 = vld [vmem:[%s1 + $0x158] sm:$0xf]
  %v116 = vld [vmem:[%s1 + $0x15c] sm:$0xf]
  %v117 = vld [vmem:[%s1 + $0x160] sm:$0xf]
  %v118 = vld [vmem:[%s1 + $0x164] sm:$0xf]
  %v119 = vld [vmem:[%s1 + $0x168] sm:$0xf]
  %v120 = vld [vmem:[%s1 + $0x16c] sm:$0xf]
  %v121 = vld [vmem:[%s1 + $0x170] sm:$0xf]
  %v122 = vld [vmem:[%s1 + $0x174] sm:$0xf]
  %v123 = vld [vmem:[%s1 + $0x178] sm:$0xf]
  %v124 = vld [vmem:[%s1 + $0x17c] sm:$0xf]
  %v125 = vld [vmem:[%s1 + $0x180] sm:$0xf]
  %v126 = vld [vmem:[%s1 + $0x184] sm:$0xf]
  %v127 = vld [vmem:[%s2] sm:$0x1]
  %v129 = vlaneseq
  %v130 = vshrl.u32 %v129, 7
  %v131 = vsub.s32 0, %v130
  %v132 = vrot.slane %v127, %v131
  %v142 = vunpack.c.l.b16 %v21
  %v143 = vunpack.c.h.b16 %v21
  %v144 = vunpack.c.l.b16 %v22
  %v145 = vunpack.c.h.b16 %v22
  %v146 = vunpack.c.l.b16 %v23
  %v147 = vunpack.c.h.b16 %v23
  %v148 = vunpack.c.l.b16 %v24
  %v149 = vunpack.c.l.b16 %v25
  %v150 = vunpack.c.h.b16 %v25
  %v151 = vunpack.c.l.b16 %v26
  %v152 = vunpack.c.h.b16 %v26
  %v153 = vunpack.c.l.b16 %v27
  %v154 = vunpack.c.h.b16 %v27
  %v155 = vunpack.c.l.b16 %v28
  %v156 = vpack.c.b16 %v149, %v142
  %v157 = vpack.c.b16 %v150, %v143
  %v158 = vpack.c.b16 %v151, %v144
  %v159 = vpack.c.b16 %v152, %v145
  %v160 = vpack.c.b16 %v153, %v146
  %v161 = vpack.c.b16 %v154, %v147
  %v162 = vpack.c.b16 %v155, %v148
  %v267 = vunpack.c.l.b16 %v29
  %v268 = vunpack.c.l.b16 %v30
  %v269 = vunpack.c.l.b16 %v31
  %v270 = vunpack.c.l.b16 %v32
  %v271 = vunpack.c.l.b16 %v33
  %v272 = vunpack.c.l.b16 %v34
  %v273 = vunpack.c.l.b16 %v35
  %v274 = vunpack.c.l.b16 %v36
  %v275 = vunpack.c.l.b16 %v37
  %v276 = vunpack.c.l.b16 %v38
  %v277 = vunpack.c.l.b16 %v39
  %v278 = vunpack.c.l.b16 %v40
  %v279 = vunpack.c.l.b16 %v41
  %v280 = vunpack.c.l.b16 %v42
  %v281 = vunpack.c.l.b16 %v43
  %v282 = vunpack.c.l.b16 %v44
  %v283 = vunpack.c.l.b16 %v45
  %v284 = vunpack.c.l.b16 %v46
  %v285 = vunpack.c.l.b16 %v47
  %v286 = vunpack.c.l.b16 %v48
  %v287 = vunpack.c.l.b16 %v49
  %v288 = vunpack.c.l.b16 %v50
  %v289 = vunpack.c.l.b16 %v51
  %v290 = vunpack.c.l.b16 %v52
  %v291 = vunpack.c.l.b16 %v53
  %v292 = vunpack.c.l.b16 %v54
  %v293 = vunpack.c.l.b16 %v55
  %v294 = vunpack.c.l.b16 %v56
  %v295 = vunpack.c.l.b16 %v57
  %v296 = vunpack.c.l.b16 %v58
  %v297 = vunpack.c.l.b16 %v59
  %v298 = vunpack.c.l.b16 %v60
  %v299 = vunpack.c.l.b16 %v61
  %v300 = vunpack.c.l.b16 %v62
  %v301 = vunpack.c.l.b16 %v63
  %v302 = vunpack.c.l.b16 %v64
  %v303 = vunpack.c.l.b16 %v65
  %v304 = vunpack.c.l.b16 %v66
  %v305 = vunpack.c.l.b16 %v67
  %v306 = vunpack.c.l.b16 %v68
  %v307 = vunpack.c.l.b16 %v69
  %v308 = vunpack.c.l.b16 %v70
  %v309 = vunpack.c.l.b16 %v71
  %v310 = vunpack.c.l.b16 %v72
  %v311 = vunpack.c.l.b16 %v73
  %v312 = vunpack.c.l.b16 %v74
  %v313 = vunpack.c.l.b16 %v75
  %v314 = vunpack.c.l.b16 %v76
  %v315 = vunpack.c.l.b16 %v77
  %v316 = vunpack.c.l.b16 %v78
  %v317 = vunpack.c.l.b16 %v79
  %v318 = vunpack.c.l.b16 %v80
  %v319 = vunpack.c.l.b16 %v81
  %v320 = vunpack.c.l.b16 %v82
  %v321 = vunpack.c.l.b16 %v83
  %v322 = vunpack.c.l.b16 %v84
  %v323 = vunpack.c.l.b16 %v85
  %v324 = vunpack.c.l.b16 %v86
  %v325 = vunpack.c.l.b16 %v87
  %v326 = vunpack.c.l.b16 %v88
  %v327 = vunpack.c.l.b16 %v89
  %v328 = vunpack.c.l.b16 %v90
  %v329 = vunpack.c.l.b16 %v91
  %v330 = vunpack.c.l.b16 %v92
  %v331 = vunpack.c.l.b16 %v93
  %v332 = vunpack.c.l.b16 %v94
  %v333 = vunpack.c.l.b16 %v95
  %v334 = vunpack.c.l.b16 %v96
  %v335 = vunpack.c.l.b16 %v97
  %v336 = vunpack.c.l.b16 %v98
  %v337 = vunpack.c.l.b16 %v99
  %v338 = vunpack.c.l.b16 %v100
  %v339 = vunpack.c.l.b16 %v101
  %v340 = vunpack.c.l.b16 %v102
  %v341 = vunpack.c.l.b16 %v103
  %v342 = vunpack.c.l.b16 %v104
  %v343 = vunpack.c.l.b16 %v105
  %v344 = vunpack.c.l.b16 %v106
  %v345 = vunpack.c.l.b16 %v107
  %v346 = vunpack.c.l.b16 %v108
  %v347 = vunpack.c.l.b16 %v109
  %v348 = vunpack.c.l.b16 %v110
  %v349 = vunpack.c.l.b16 %v111
  %v350 = vunpack.c.l.b16 %v112
  %v351 = vunpack.c.l.b16 %v113
  %v352 = vunpack.c.l.b16 %v114
  %v353 = vunpack.c.l.b16 %v115
  %v354 = vunpack.c.l.b16 %v116
  %v355 = vunpack.c.l.b16 %v117
  %v356 = vunpack.c.l.b16 %v118
  %v357 = vunpack.c.l.b16 %v119
  %v358 = vunpack.c.l.b16 %v120
  %v359 = vunpack.c.l.b16 %v121
  %v360 = vunpack.c.l.b16 %v122
  %v361 = vunpack.c.l.b16 %v123
  %v362 = vunpack.c.l.b16 %v124
  %v363 = vunpack.c.l.b16 %v125
  %v364 = vunpack.c.l.b16 %v126
  %v365 = vpack.c.b16 %v268, %v267
  %v366 = vpack.c.b16 %v270, %v269
  %v367 = vpack.c.b16 %v272, %v271
  %v368 = vpack.c.b16 %v274, %v273
  %v369 = vpack.c.b16 %v276, %v275
  %v370 = vpack.c.b16 %v278, %v277
  %v371 = vpack.c.b16 %v280, %v279
  %v372 = vpack.c.b16 %v282, %v281
  %v373 = vpack.c.b16 %v284, %v283
  %v374 = vpack.c.b16 %v286, %v285
  %v375 = vpack.c.b16 %v288, %v287
  %v376 = vpack.c.b16 %v290, %v289
  %v377 = vpack.c.b16 %v292, %v291
  %v378 = vpack.c.b16 %v294, %v293
  %v379 = vpack.c.b16 %v296, %v295
  %v380 = vpack.c.b16 %v298, %v297
  %v381 = vpack.c.b16 %v300, %v299
  %v382 = vpack.c.b16 %v302, %v301
  %v383 = vpack.c.b16 %v304, %v303
  %v384 = vpack.c.b16 %v306, %v305
  %v385 = vpack.c.b16 %v308, %v307
  %v386 = vpack.c.b16 %v310, %v309
  %v387 = vpack.c.b16 %v312, %v311
  %v388 = vpack.c.b16 %v314, %v313
  %v389 = vpack.c.b16 %v316, %v315
  %v390 = vpack.c.b16 %v318, %v317
  %v391 = vpack.c.b16 %v320, %v319
  %v392 = vpack.c.b16 %v322, %v321
  %v393 = vpack.c.b16 %v324, %v323
  %v394 = vpack.c.b16 %v326, %v325
  %v395 = vpack.c.b16 %v328, %v327
  %v396 = vpack.c.b16 %v330, %v329
  %v397 = vpack.c.b16 %v332, %v331
  %v398 = vpack.c.b16 %v334, %v333
  %v399 = vpack.c.b16 %v336, %v335
  %v400 = vpack.c.b16 %v338, %v337
  %v401 = vpack.c.b16 %v340, %v339
  %v402 = vpack.c.b16 %v342, %v341
  %v403 = vpack.c.b16 %v344, %v343
  %v404 = vpack.c.b16 %v346, %v345
  %v405 = vpack.c.b16 %v348, %v347
  %v406 = vpack.c.b16 %v350, %v349
  %v407 = vpack.c.b16 %v352, %v351
  %v408 = vpack.c.b16 %v354, %v353
  %v409 = vpack.c.b16 %v356, %v355
  %v410 = vpack.c.b16 %v358, %v357
  %v411 = vpack.c.b16 %v360, %v359
  %v412 = vpack.c.b16 %v362, %v361
  %v413 = vpack.c.b16 %v364, %v363
  %vm463 = vcmask 130048
  %v465 = vsel %vm463, %v162, 0
  %467 = vmatprep.subr.bf16.mxu0 0
  %468 = vmatpush1.bf16.msra.mxu0 %v372
  %469 = vmatprep.subr.bf16.mxu0 0
  %470 = vmatpush1.bf16.msra.mxu0 %v371
  %471 = vmatprep.subr.bf16.mxu0 0
  %472 = vmatpush1.bf16.msra.mxu0 %v370
  %473 = vmatprep.subr.bf16.mxu0 0
  %474 = vmatpush1.bf16.msra.mxu0 %v369
  %475 = vmatprep.subr.bf16.mxu0 0
  %476 = vmatpush1.bf16.msra.mxu0 %v368
  %477 = vmatprep.subr.bf16.mxu0 0
  %478 = vmatpush1.bf16.msra.mxu0 %v367
  %479 = vmatprep.subr.bf16.mxu0 0
  %480 = vmatpush1.bf16.msra.mxu0 %v366
  %481 = vmatprep.subr.bf16.mxu0 0
  %482 = vmatpush1.bf16.msra.mxu0 %v365
  %483 = vmatprep.subr.bf16.mxu0 0
  %484 = vmatpush2.bf16.msra.mxu0 %v380
  %485 = vmatprep.subr.bf16.mxu0 0
  %486 = vmatpush2.bf16.msra.mxu0 %v379
  %487 = vmatprep.subr.bf16.mxu0 0
  %488 = vmatpush2.bf16.msra.mxu0 %v378
  %489 = vmatprep.subr.bf16.mxu0 0
  %490 = vmatpush2.bf16.msra.mxu0 %v377
  %491 = vmatprep.subr.bf16.mxu0 0
  %492 = vmatpush2.bf16.msra.mxu0 %v376
  %493 = vmatprep.subr.bf16.mxu0 0
  %494 = vmatpush2.bf16.msra.mxu0 %v375
  %495 = vmatprep.subr.bf16.mxu0 0
  %496 = vmatpush2.bf16.msra.mxu0 %v374
  %497 = vmatprep.subr.bf16.mxu0 0
  %498 = vmatpush2.bf16.msra.mxu0 %v373
  %499 = vmatprep.mubr.bf16.mxu0 %v157
  %500 = vmatmul.mubr.bf16.gmra.mxu0 %v156
  %v501 = vpop.f32.mrf.mxu0
  %v502 = vadd.f32 %v132, %v501
  %v503 = vpop.f32.mrf.mxu0
  %v504 = vpop.f32.mrf.mxu0
  %v505 = vadd.f32 %v132, %v504
  %v506 = vpop.f32.mrf.mxu0
  %507 = vdwg.mxu0
  %508 = vmatprep.subr.bf16.mxu0 0
  %509 = vmatpush1.bf16.msra.mxu0 %v388
  %510 = vmatprep.subr.bf16.mxu0 0
  %511 = vmatpush1.bf16.msra.mxu0 %v387
  %512 = vmatprep.subr.bf16.mxu0 0
  %513 = vmatpush1.bf16.msra.mxu0 %v386
  %514 = vmatprep.subr.bf16.mxu0 0
  %515 = vmatpush1.bf16.msra.mxu0 %v385
  %516 = vmatprep.subr.bf16.mxu0 0
  %517 = vmatpush1.bf16.msra.mxu0 %v384
  %518 = vmatprep.subr.bf16.mxu0 0
  %519 = vmatpush1.bf16.msra.mxu0 %v383
  %520 = vmatprep.subr.bf16.mxu0 0
  %521 = vmatpush1.bf16.msra.mxu0 %v382
  %522 = vmatprep.subr.bf16.mxu0 0
  %523 = vmatpush1.bf16.msra.mxu0 %v381
  %524 = vmatprep.subr.bf16.mxu0 0
  %525 = vmatpush2.bf16.msra.mxu0 %v396
  %526 = vmatprep.subr.bf16.mxu0 0
  %527 = vmatpush2.bf16.msra.mxu0 %v395
  %528 = vmatprep.subr.bf16.mxu0 0
  %529 = vmatpush2.bf16.msra.mxu0 %v394
  %530 = vmatprep.subr.bf16.mxu0 0
  %531 = vmatpush2.bf16.msra.mxu0 %v393
  %532 = vmatprep.subr.bf16.mxu0 0
  %533 = vmatpush2.bf16.msra.mxu0 %v392
  %534 = vmatprep.subr.bf16.mxu0 0
  %535 = vmatpush2.bf16.msra.mxu0 %v391
  %536 = vmatprep.subr.bf16.mxu0 0
  %537 = vmatpush2.bf16.msra.mxu0 %v390
  %538 = vmatprep.subr.bf16.mxu0 0
  %539 = vmatpush2.bf16.msra.mxu0 %v389
  %540 = vmatprep.mubr.bf16.mxu0 %v159
  %541 = vmatmul.mubr.bf16.gmra.mxu0 %v158
  %v542 = vpop.f32.mrf.mxu0
  %v543 = vadd.f32 %v502, %v542
  %v544 = vpop.f32.mrf.mxu0
  %v545 = vpop.f32.mrf.mxu0
  %v546 = vadd.f32 %v505, %v545
  %v547 = vpop.f32.mrf.mxu0
  %548 = vdwg.mxu0
  %549 = vmatprep.subr.bf16.mxu0 0
  %550 = vmatpush1.bf16.msra.mxu0 %v404
  %551 = vmatprep.subr.bf16.mxu0 0
  %552 = vmatpush1.bf16.msra.mxu0 %v403
  %553 = vmatprep.subr.bf16.mxu0 0
  %554 = vmatpush1.bf16.msra.mxu0 %v402
  %555 = vmatprep.subr.bf16.mxu0 0
  %556 = vmatpush1.bf16.msra.mxu0 %v401
  %557 = vmatprep.subr.bf16.mxu0 0
  %558 = vmatpush1.bf16.msra.mxu0 %v400
  %559 = vmatprep.subr.bf16.mxu0 0
  %560 = vmatpush1.bf16.msra.mxu0 %v399
  %561 = vmatprep.subr.bf16.mxu0 0
  %562 = vmatpush1.bf16.msra.mxu0 %v398
  %563 = vmatprep.subr.bf16.mxu0 0
  %564 = vmatpush1.bf16.msra.mxu0 %v397
  %565 = vmatprep.subr.bf16.mxu0 0
  %566 = vmatpush2.bf16.msra.mxu0 %v412
  %567 = vmatprep.subr.bf16.mxu0 0
  %568 = vmatpush2.bf16.msra.mxu0 %v411
  %569 = vmatprep.subr.bf16.mxu0 0
  %570 = vmatpush2.bf16.msra.mxu0 %v410
  %571 = vmatprep.subr.bf16.mxu0 0
  %572 = vmatpush2.bf16.msra.mxu0 %v409
  %573 = vmatprep.subr.bf16.mxu0 0
  %574 = vmatpush2.bf16.msra.mxu0 %v408
  %575 = vmatprep.subr.bf16.mxu0 0
  %576 = vmatpush2.bf16.msra.mxu0 %v407
  %577 = vmatprep.subr.bf16.mxu0 0
  %578 = vmatpush2.bf16.msra.mxu0 %v406
  %579 = vmatprep.subr.bf16.mxu0 0
  %580 = vmatpush2.bf16.msra.mxu0 %v405
  %581 = vmatprep.mubr.bf16.mxu0 %v161
  %582 = vmatmul.mubr.bf16.gmra.mxu0 %v160
  %v583 = vpop.f32.mrf.mxu0
  %v584 = vadd.f32 %v543, %v583
  %v585 = vpop.f32.mrf.mxu0
  %v586 = vpop.f32.mrf.mxu0
  %v587 = vadd.f32 %v546, %v586
  %v588 = vpop.f32.mrf.mxu0
  %589 = vdwg.mxu0
  %590 = vmatprep.subr.bf16.mxu0 0
  %591 = vmatpush1.bf16.msra.mxu0 0
  %592 = vmatprep.subr.bf16.mxu0 0
  %593 = vmatpush1.bf16.msra.mxu0 0
  %594 = vmatprep.subr.bf16.mxu0 0
  %595 = vmatpush1.bf16.msra.mxu0 0
  %596 = vmatprep.subr.bf16.mxu0 0
  %597 = vmatpush1.bf16.msra.mxu0 0
  %598 = vmatprep.subr.bf16.mxu0 0
  %599 = vmatpush1.bf16.msra.mxu0 0
  %600 = vmatprep.subr.bf16.mxu0 0
  %601 = vmatpush1.bf16.msra.mxu0 0
  %602 = vmatprep.subr.bf16.mxu0 0
  %603 = vmatpush1.bf16.msra.mxu0 0
  %604 = vmatprep.subr.bf16.mxu0 0
  %605 = vmatpush1.bf16.msra.mxu0 %v413
  %606 = vmatprep.subr.bf16.mxu0 0
  %607 = vmatpush2.bf16.msra.mxu0 0
  %608 = vmatprep.subr.bf16.mxu0 0
  %609 = vmatpush2.bf16.msra.mxu0 0
  %610 = vmatprep.subr.bf16.mxu0 0
  %611 = vmatpush2.bf16.msra.mxu0 0
  %612 = vmatprep.subr.bf16.mxu0 0
  %613 = vmatpush2.bf16.msra.mxu0 0
  %614 = vmatprep.subr.bf16.mxu0 0
  %615 = vmatpush2.bf16.msra.mxu0 0
  %616 = vmatprep.subr.bf16.mxu0 0
  %617 = vmatpush2.bf16.msra.mxu0 0
  %618 = vmatprep.subr.bf16.mxu0 0
  %619 = vmatpush2.bf16.msra.mxu0 0
  %620 = vmatprep.subr.bf16.mxu0 0
  %621 = vmatpush2.bf16.msra.mxu0 0
  %622 = vmatprep.mubr.bf16.mxu0 0
  %623 = vmatmul.mubr.bf16.gmra.mxu0 %v465
  %v624 = vpop.f32.mrf.mxu0
  %v625 = vadd.f32 %v584, %v624
  %v626 = vpop.f32.mrf.mxu0
  %v627 = vpop.f32.mrf.mxu0
  %v628 = vadd.f32 %v587, %v627
  %v629 = vpop.f32.mrf.mxu0
  %630 = vdwg.mxu0
  %v631 = vmax.f32 %v625, 0.0
  %v632 = vmax.f32 %v628, 0.0
  %v633 = vpack.c.bf16 %v632, %v631
  %v634 = vld [vmem:[%s3] sm:$0xf]
  %v635 = vld [vmem:[%s3 + $0x4] sm:$0xf]
  %v636 = vld [vmem:[%s3 + $0x8] sm:$0xf]
  %v637 = vld [vmem:[%s3 + $0xc] sm:$0xf]
  %v638 = vld [vmem:[%s3 + $0x10] sm:$0xf]
  %v639 = vld [vmem:[%s3 + $0x14] sm:$0xf]
  %v640 = vld [vmem:[%s3 + $0x18] sm:$0xf]
  %v641 = vld [vmem:[%s3 + $0x1c] sm:$0xf]
  %v642 = vld [vmem:[%s3 + $0x20] sm:$0xf]
  %v643 = vld [vmem:[%s3 + $0x24] sm:$0xf]
  %v644 = vld [vmem:[%s3 + $0x28] sm:$0xf]
  %v645 = vld [vmem:[%s3 + $0x2c] sm:$0xf]
  %v646 = vld [vmem:[%s3 + $0x30] sm:$0xf]
  %v647 = vld [vmem:[%s3 + $0x34] sm:$0xf]
  %v648 = vld [vmem:[%s3 + $0x38] sm:$0xf]
  %v649 = vld [vmem:[%s3 + $0x3c] sm:$0xf]
  %v650 = vld [vmem:[%s4] sm:$0x1]
  %v652 = vlaneseq
  %v653 = vshrl.u32 %v652, 7
  %v654 = vsub.s32 0, %v653
  %v655 = vrot.slane %v650, %v654
  %v673 = vunpack.c.l.b16 %v634
  %v674 = vunpack.c.l.b16 %v635
  %v675 = vunpack.c.l.b16 %v636
  %v676 = vunpack.c.l.b16 %v637
  %v677 = vunpack.c.l.b16 %v638
  %v678 = vunpack.c.l.b16 %v639
  %v679 = vunpack.c.l.b16 %v640
  %v680 = vunpack.c.l.b16 %v641
  %v681 = vunpack.c.l.b16 %v642
  %v682 = vunpack.c.l.b16 %v643
  %v683 = vunpack.c.l.b16 %v644
  %v684 = vunpack.c.l.b16 %v645
  %v685 = vunpack.c.l.b16 %v646
  %v686 = vunpack.c.l.b16 %v647
  %v687 = vunpack.c.l.b16 %v648
  %v688 = vunpack.c.l.b16 %v649
  %v689 = vpack.c.b16 %v674, %v673
  %v690 = vpack.c.b16 %v676, %v675
  %v691 = vpack.c.b16 %v678, %v677
  %v692 = vpack.c.b16 %v680, %v679
  %v693 = vpack.c.b16 %v682, %v681
  %v694 = vpack.c.b16 %v684, %v683
  %v695 = vpack.c.b16 %v686, %v685
  %v696 = vpack.c.b16 %v688, %v687
  %705 = vmatprep.subr.bf16.mxu0 0
  %706 = vmatpush1.bf16.msra.mxu0 %v696
  %707 = vmatprep.subr.bf16.mxu0 0
  %708 = vmatpush1.bf16.msra.mxu0 %v695
  %709 = vmatprep.subr.bf16.mxu0 0
  %710 = vmatpush1.bf16.msra.mxu0 %v694
  %711 = vmatprep.subr.bf16.mxu0 0
  %712 = vmatpush1.bf16.msra.mxu0 %v693
  %713 = vmatprep.subr.bf16.mxu0 0
  %714 = vmatpush1.bf16.msra.mxu0 %v692
  %715 = vmatprep.subr.bf16.mxu0 0
  %716 = vmatpush1.bf16.msra.mxu0 %v691
  %717 = vmatprep.subr.bf16.mxu0 0
  %718 = vmatpush1.bf16.msra.mxu0 %v690
  %719 = vmatprep.subr.bf16.mxu0 0
  %720 = vmatpush1.bf16.msra.mxu0 %v689
  %721 = vmatprep.subr.bf16.mxu0 0
  %722 = vmatpush2.bf16.msra.mxu0 0
  %723 = vmatprep.subr.bf16.mxu0 0
  %724 = vmatpush2.bf16.msra.mxu0 0
  %725 = vmatprep.subr.bf16.mxu0 0
  %726 = vmatpush2.bf16.msra.mxu0 0
  %727 = vmatprep.subr.bf16.mxu0 0
  %728 = vmatpush2.bf16.msra.mxu0 0
  %729 = vmatprep.subr.bf16.mxu0 0
  %730 = vmatpush2.bf16.msra.mxu0 0
  %731 = vmatprep.subr.bf16.mxu0 0
  %732 = vmatpush2.bf16.msra.mxu0 0
  %733 = vmatprep.subr.bf16.mxu0 0
  %734 = vmatpush2.bf16.msra.mxu0 0
  %735 = vmatprep.subr.bf16.mxu0 0
  %736 = vmatpush2.bf16.msra.mxu0 0
  %737 = vmatprep.mubr.bf16.mxu0 0
  %738 = vmatmul.mubr.bf16.gmra.mxu0 %v633
  %v739 = vpop.f32.mrf.mxu0
  %v740 = vadd.f32 %v655, %v739
  %v741 = vpop.f32.mrf.mxu0
  %v742 = vpop.f32.mrf.mxu0
  %v743 = vadd.f32 %v655, %v742
  %v744 = vpop.f32.mrf.mxu0
  %745 = vdwg.mxu0
  %746 = vst [vmem:[%s5] sm:$0xff] %v740
  %747 = vst [vmem:[%s5 + $0x8] sm:$0xff] %v743
  // Predicated region
  $region22: #{fc_forward.1} parent=0 // pred_check
    _
  $region23: #{fc_forward.1} parent=0 // pred_check_branch
    %749 = sbr.rel (0) target = $region25
  $region24: #{fc_forward.1} parent=0 // pred_region
    _
  $region25: #{fc_forward.1} parent=0 // pred_fallthru
    _
  // Predicated region
  $region26: #{fc_forward.1} parent=0 // pred_check
    _
  $region27: #{fc_forward.1} parent=0 // pred_check_branch
    %751 = sbr.rel (0) target = $region29
  $region28: #{fc_forward.1} parent=0 // pred_region
    _
  $region29: #{fc_forward.1} parent=0 // pred_fallthru
    _

</llo_original>
